<compile_context>
chip_gen: v6e
topology: v6e:2x2x1
jax: 0.10.0
libtpu: 0.0.40
codegen_flags: <defaults>
</compile_context>

<pallas_src>
import jax
import jax.numpy as jnp
from jax.experimental import pallas as pl
from jax.experimental.pallas import tpu as pltpu


def _vmem_budget():
    """Return (vmem_limit_bytes, max_block_bytes) sized for this TPU generation."""
    default_capacity = 64 * 1024 * 1024  # assume the smallest (v7x) if query fails
    try:
        capacity = int(pltpu.get_tpu_info().vmem_capacity_bytes)
    except Exception:  # pragma: no cover - query not available (e.g. interpret mode)
        capacity = default_capacity
    # in + out, each double-buffered => VMEM footprint ~= 4 x tile; keep 2x headroom.
    vmem_limit = min(64 * 1024 * 1024, capacity // 2)
    max_block_bytes = vmem_limit // 8
    return vmem_limit, max_block_bytes


def _sublane_multiple(dtype) -> int:
    """Native sublane packing: 8 rows for 32-bit, 16 for 16-bit, 32 for 8-bit."""
    itemsize = jnp.dtype(dtype).itemsize
    return max(8, 32 // max(1, itemsize))


def _round_block_rows(rows: int, budget_rows: int, sublane: int) -> int:
    """Pick a block row count <= budget_rows, sublane-aligned, preferring divisors."""
    block_rows = min(rows, max(1, budget_rows))
    if block_rows >= rows:
        return rows
    # Round down to the dtype's sublane packing.
    block_rows = max(sublane, (block_rows // sublane) * sublane)
    block_rows = min(block_rows, rows)
    # Prefer a block size that divides rows so the last grid step is a full tile,
    # but don't shrink below half the budgeted size to find one.
    cand = block_rows
    floor = max(sublane, block_rows // 2)
    while cand >= floor:
        if rows % cand == 0:
            return cand
        cand -= sublane
    return block_rows


def _identity_kernel(x_ref, o_ref):
    # Pure pass-through tile copy (debug path only; the module forward has no math).
    o_ref[...] = x_ref[...]


def _debug_identity_copy(x: jax.Array) -> jax.Array:
    """Debug-only Pallas identity copy of `x` (lane-dense, tiled, parallel grid).

    Not called from `my_vis_forward` — the reference forward is a no-op, so any
    copy would be dead work.  This exists solely to exercise the Pallas path.
    """
    orig_shape = x.shape
    total = x.size
    vmem_limit, max_block_bytes = _vmem_budget()
    sublane = _sublane_multiple(x.dtype)
    itemsize = jnp.dtype(x.dtype).itemsize
    compiler_params = pltpu.CompilerParams(
        dimension_semantics=("parallel",),
        vmem_limit_bytes=vmem_limit,
    )

    # Pick the widest lane-dense 2-D view: last dim a (large) multiple of 128.
    cols = 0
    for cand in (32768, 16384, 8192, 4096, 2048, 1024, 512, 256, 128):
        if total % cand == 0:
            cols = cand
            break

    if cols == 0:
        # Element count not a multiple of 128: tile over the leading dims with the
        # full last dim as the lane axis (full-extent last dim satisfies the
        # (8, 128) rule), same VMEM budget and compiler params as the main path.
        last = orig_shape[-1]
        lead = total // last
        x2d = x.reshape(lead, last)
        bytes_per_row = last * itemsize
        block_lead = _round_block_rows(
            lead, max_block_bytes // max(1, bytes_per_row), sublane
        )
        if block_lead < lead and block_lead % 8 != 0:
            block_lead = lead  # keep the (8,128) rule: full extent if unalignable
        grid = (pl.cdiv(lead, block_lead),)
        y2d = pl.pallas_call(
            _identity_kernel,
            out_shape=jax.ShapeDtypeStruct((lead, last), x2d.dtype),
            grid=grid,
            in_specs=[pl.BlockSpec((block_lead, last), lambda i: (i, 0))],
            out_specs=pl.BlockSpec((block_lead, last), lambda i: (i, 0)),
            compiler_params=compiler_params,
        )(x2d)
        return y2d.reshape(orig_shape)

    rows = total // cols
    x2d = x.reshape(rows, cols)

    # Size blocks purely by the per-generation byte budget (no arbitrary row cap).
    bytes_per_row = cols * itemsize
    block_rows = _round_block_rows(rows, max_block_bytes // bytes_per_row, sublane)

    # v7x has 2 TensorCores: keep >= 2 grid steps when the array is splittable so
    # both cores' DMA engines participate.
    if block_rows >= rows and rows >= 2 * sublane:
        half = pl.cdiv(rows, 2)
        block_rows = max(sublane, (half // sublane) * sublane)

    grid = (pl.cdiv(rows, block_rows),)

    y2d = pl.pallas_call(
        _identity_kernel,
        out_shape=jax.ShapeDtypeStruct((rows, cols), x2d.dtype),
        grid=grid,
        in_specs=[pl.BlockSpec((block_rows, cols), lambda i: (i, 0))],
        out_specs=pl.BlockSpec((block_rows, cols), lambda i: (i, 0)),
        compiler_params=compiler_params,
    )(x2d)
    return y2d.reshape(orig_shape)


def my_vis_forward(images, outputs, prefix):
    """JAX equivalent of MyVis.forward.

    The PyTorch forward performs no computation and returns None, so this does
    exactly that: no Pallas call, no HBM reads/writes, no host sync, and
    `outputs` is never materialized/read on this path.
    """
    del images, outputs, prefix  # intentionally unused — forward is a no-op
    return None


if __name__ == "__main__":
    key = jax.random.PRNGKey(0)
    k_img, k_out = jax.random.split(key)

    # Small shapes consistent with an image/outputs pair (NCHW).
    images = jax.random.normal(k_img, (2, 4, 16, 16), dtype=jnp.float32)
    outputs = jax.random.normal(k_out, (2, 4, 16, 16), dtype=jnp.float32)
    prefix = "vis"

    # Forward matches PyTorch semantics exactly: returns None, does no work.
    result = my_vis_forward(images, outputs, prefix)
    assert result is None

    # Exercise the debug-only Pallas kernel once and verify the round-trip.
    y = jax.block_until_ready(_debug_identity_copy(images))
    assert jnp.array_equal(y, images)

    print("KERNEL_OK")
</pallas_src>

<mosaic_0001>
module attributes {stable_mosaic.version = 11 : i64} {
  func.func @_identity_kernel(%arg0: i32, %arg1: memref<1x2048xf32, #tpu.memory_space<vmem>>, %arg2: memref<1x2048xf32, #tpu.memory_space<vmem>>) attributes {dimension_semantics = [#tpu.dimension_semantics<parallel>], iteration_bounds = array<i64: 1>, scalar_prefetch = 0 : i64, scratch_operands = 0 : i64, tpu.core_type = #tpu.core_type<tc>, window_params = [{transform_indices = @transform_0, window_bounds = array<i64: 1, 2048>}, {transform_indices = @transform_1, window_bounds = array<i64: 1, 2048>}]} {
    %c0 = arith.constant 0 : index
    %c0_0 = arith.constant 0 : index
    %0 = vector.load %arg1[%c0, %c0_0] : memref<1x2048xf32, #tpu.memory_space<vmem>>, vector<1x2048xf32>
    %c0_1 = arith.constant 0 : index
    %c0_2 = arith.constant 0 : index
    %1 = vector.load %arg2[%c0_1, %c0_2] : memref<1x2048xf32, #tpu.memory_space<vmem>>, vector<1x2048xf32>
    tpu.vector_store %arg2[%c0_1, %c0_2], %0 {strides = array<i32>} : memref<1x2048xf32, #tpu.memory_space<vmem>>, vector<1x2048xf32>,
    return
  }
  func.func @transform_0(%arg0: i32) -> (i32, i32) {
    %c0_i32 = arith.constant 0 : i32
    %c0_i32_0 = arith.constant 0 : i32
    return %arg0, %c0_i32 : i32, i32
  }
  func.func @transform_1(%arg0: i32) -> (i32, i32) {
    %c0_i32 = arith.constant 0 : i32
    %c0_i32_0 = arith.constant 0 : i32
    return %arg0, %c0_i32 : i32, i32
  }
}

</mosaic_0001>

<llo_original>
// kernel: tpu_custom_call.1
$region0: #{tpu_custom_call.1}
  #allocation0 [shape = 'u32[]', space=smem, size = 0x4, offset = 0x4, fixed_abs, tag = 'smem constant byte address 0x4 - core index']
  #allocation1 [shape = 'u32[144,128]{1,0:T(1,128)}', space=vmem, size = 0x12000, scoped, tag = 'internal scratch']
  %s0 = inlined_call_operand.hbm [shape: f32[1,2048], index: 0, kind: input, shape index: {}]
  %s1 = inlined_call_operand.hbm [shape: f32[1,2048], index: 1, kind: output, shape index: {}]
  %s2 = sld [smem:[#allocation0]]
  $region18: #{tpu_custom_call.1} parent=0
    _
  %s4 = ssub.s32 1, %s2
  %s5 = scalar_select 0, %s4, %s2
  $region1: #{tpu_custom_call.1} parent=0
    #allocation2 [shape = 'u8[8192]{0}', space=vmem, size = 0x2000, scoped, tag = 'input window, operand 0, single buffered']
    #allocation3 [shape = 's32[1]{0}', space=sflag, size = 0x4, scoped, tag = 'scoped memory for tpu_custom_call.1']
    #allocation4 [shape = 's32[1]{0}', space=sflag, size = 0x4, scoped, tag = 'scoped memory for tpu_custom_call.1']
    #allocation5 [shape = 'u8[8192]{0}', space=vmem, size = 0x2000, scoped, tag = 'output window, operand 0, single buffered']
    %6 = vsyncpa [#allocation3], 0
    %7 = vsyncpa [#allocation4], 0
    // Predicated region
    $region2: #{tpu_custom_call.1} parent=1 // pred_check
      _
    $region3: #{tpu_custom_call.1} parent=1 // pred_check_branch
      %9 = sbr.rel (0) target = $region5
    $region4: #{tpu_custom_call.1} parent=1 // pred_region
      %s11 = ssub.s32 256, 256
      %12 = vsyncadd [#allocation3], %s11
      %s14 = sshll.u32 [#allocation2], 4
      %s15 = int_to_ptr.vmem [resolvable:$true] %s14
      %17 = dma.hbm_to_vmem [thread:$0]  %s0, 256, %s15, [#allocation3]
    $region5: #{tpu_custom_call.1} parent=1 // pred_fallthru
      _
    // Predicated region
    $region6: #{tpu_custom_call.1} parent=1 // pred_check
      _
    $region7: #{tpu_custom_call.1} parent=1 // pred_check_branch
      %19 = sbr.rel (0) target = $region9
    $region8: #{tpu_custom_call.1} parent=1 // pred_region
      %20 = dma.done [#allocation3], 256
    $region9: #{tpu_custom_call.1} parent=1 // pred_fallthru
      _
    %v21 = vld [vmem:[#allocation2] sm:$0xff]
    %v22 = vld [vmem:[#allocation2 + $0x8] sm:$0xff]
    %23 = vst [vmem:[#allocation5] sm:$0xff] %v21
    %24 = vst [vmem:[#allocation5 + $0x8] sm:$0xff] %v22
    // Predicated region
    $region10: #{tpu_custom_call.1} parent=1 // pred_check
      _
    $region11: #{tpu_custom_call.1} parent=1 // pred_check_branch
      %26 = sbr.rel (0) target = $region13
    $region12: #{tpu_custom_call.1} parent=1 // pred_region
      %s28 = ssub.s32 256, 256
      %29 = vsyncadd [#allocation4], %s28
      %s31 = sshll.u32 [#allocation5], 4
      %s32 = int_to_ptr.vmem [resolvable:$true] %s31
      %34 = dma.vmem_to_hbm [thread:$0]  %s32, 256, %s1, [#allocation4]
    $region13: #{tpu_custom_call.1} parent=1 // pred_fallthru
      _
    // Predicated region
    $region14: #{tpu_custom_call.1} parent=1 // pred_check
      _
    $region15: #{tpu_custom_call.1} parent=1 // pred_check_branch
      %36 = sbr.rel (0) target = $region17
    $region16: #{tpu_custom_call.1} parent=1 // pred_region
      %37 = dma.done [#allocation4], 256
    $region17: #{tpu_custom_call.1} parent=1 // pred_fallthru
      _
    %38 = vsyncpa [#allocation3], 1
    %39 = vsyncpa [#allocation4], 1

</llo_original>
